<compile_context>
chip_gen: v6e
topology: v6e:2x2x1
jax: 0.10.0
libtpu: 0.0.40
codegen_flags: <defaults>
</compile_context>

<pallas_src>
import numpy as np

import jax
import jax.numpy as jnp
from jax.experimental import pallas as pl
from jax.experimental.pallas import tpu as pltpu

# ------------------------------ configuration -------------------------------
NUM_INPUT_CLIPS = 2                      # MultiTaskHead dim_in = [2048 * 2]
LTA_DIM = 2048                           # frozen-LTA middle-feature dim
IN_DIM = NUM_INPUT_CLIPS * LTA_DIM       # 4096
NUM_CLASSES = (16, 20)                   # cfg.MODEL.NUM_CLASSES (small test sizes)
CLS_TOTAL = sum(NUM_CLASSES)             # 36
NUM_ACTIONS_TO_PREDICT = 3               # cfg.FORECASTING.NUM_ACTIONS_TO_PREDICT
ZC = NUM_ACTIONS_TO_PREDICT * CLS_TOTAL  # 108
ZC_PAD = 128                             # lane-dense padded output width
BATCH = 2


# --------------------------------- kernel -----------------------------------
def fused_head_kernel(feat_ref, wq_ref, scale_ref, b_ref, o_ref):
    """decode(): all MultiTaskHead linears fused into one (split-K) MXU matmul.

    feat_ref  : (CLIPS, B, 2048) bf16  frozen-LTA middle features (seq-first)
    wq_ref    : (CLIPS, 2048, 128) int8 fused head weights, per-column quantized
    scale_ref : (1, 128) f32           per-output-column dequant scale
    b_ref     : (1, 128) f32           fused bias (zero-padded)
    o_ref     : (B, 128) f32           stacked head logits (lane-dense, padded)

    transpose(0,1)+reshape(bs, -1) of the PyTorch code is realized by splitting
    the contraction over the clip axis: x @ W_fused == feat[0] @ W[:2048] + feat[1] @ W[2048:].
    """
    f0 = feat_ref[0].astype(jnp.bfloat16)          # (B, 2048)
    f1 = feat_ref[1].astype(jnp.bfloat16)
    w0 = wq_ref[0].astype(jnp.bfloat16)            # int8 -> bf16 is exact (|q| <= 127)
    w1 = wq_ref[1].astype(jnp.bfloat16)
    acc = jnp.dot(f0, w0, preferred_element_type=jnp.float32)
    acc = acc + jnp.dot(f1, w1, preferred_element_type=jnp.float32)
    # per-column scale applied to the tiny accumulator (mathematically identical
    # to dequantizing W, but O(B*128) VPU work instead of O(4096*128)).
    o_ref[...] = acc * scale_ref[...] + b_ref[...]


# ------------------------------ pallas wrapper -------------------------------
_VMEM = pl.BlockSpec(memory_space=pltpu.MemorySpace.VMEM)


def _fused_heads(feat, wq, scale, bias):
    """Grid-less call: whole arrays resident in VMEM, single invocation for all rows."""
    bsz = feat.shape[1]
    flops = 2 * bsz * IN_DIM * ZC_PAD
    bytes_accessed = (
        feat.size * feat.dtype.itemsize      # bf16 activations
        + wq.size                            # int8 weights (dominant DMA)
        + scale.size * 4
        + bias.size * 4
        + bsz * ZC_PAD * 4                   # f32 output
    )
    return pl.pallas_call(
        fused_head_kernel,
        out_shape=jax.ShapeDtypeStruct((bsz, ZC_PAD), jnp.float32),
        in_specs=[_VMEM, _VMEM, _VMEM, _VMEM],
        out_specs=_VMEM,
        cost_estimate=pl.CostEstimate(
            flops=flops, transcendentals=0, bytes_accessed=bytes_accessed
        ),
    )(feat, wq, scale, bias)


@jax.jit
def forward(params, feat_lta_middle):
    """FinetuneLTA.forward given the frozen backbone's middle features.

    feat_lta_middle: (NUM_INPUT_CLIPS, B, 2048) bf16, seq-first as returned by the backbone.
    Returns: tuple of per-task logits, shapes (B, NUM_ACTIONS_TO_PREDICT, c) per c in NUM_CLASSES.
    """
    bs = feat_lta_middle.shape[1]
    # transpose + reshape + decode() all fused into one Pallas kernel.
    flat = _fused_heads(
        feat_lta_middle, params["head_wq"], params["head_scale"], params["head_b"]
    )                                                             # (B, 128)

    # torch.stack(..., dim=1) then torch.split(..., NUM_CLASSES, dim=-1)
    out = flat[:, :ZC].reshape(bs, NUM_ACTIONS_TO_PREDICT, CLS_TOTAL)
    sections = np.cumsum(NUM_CLASSES)[:-1].tolist()
    return tuple(jnp.split(out, sections, axis=-1))


# ------------------------------- parameters ----------------------------------
def init_params(key):
    """Build per-head PyTorch-layout weights, then fuse + int8-quantize into the kernel layout."""
    keys = jax.random.split(key, 2 * NUM_ACTIONS_TO_PREDICT)
    w_list, b_list = [], []
    for z in range(NUM_ACTIONS_TO_PREDICT):
        w_list.append(
            0.02 * jax.random.normal(keys[2 * z], (CLS_TOTAL, IN_DIM), jnp.float32)
        )
        b_list.append(
            0.02 * jax.random.normal(keys[2 * z + 1], (CLS_TOTAL,), jnp.float32)
        )
    # nn.Linear computes x @ W.T; fuse the Z heads column-wise, zero-pad to 128 lanes.
    w_fused = jnp.concatenate([w.T for w in w_list], axis=1)               # (4096, 108)
    w_fused = jnp.pad(w_fused, ((0, 0), (0, ZC_PAD - ZC)))                 # (4096, 128)

    # Per-output-column symmetric int8 quantization (halves the dominant weight DMA).
    scale = jnp.max(jnp.abs(w_fused), axis=0, keepdims=True) / 127.0       # (1, 128)
    scale = jnp.where(scale == 0.0, 1.0, scale)                            # zero-pad columns
    w_q = jnp.clip(jnp.round(w_fused / scale), -127, 127).astype(jnp.int8)
    # Split-K layout matching the (CLIPS, B, 2048) activations:
    # rows [0:2048] -> clip 0, rows [2048:4096] -> clip 1.
    w_q = w_q.reshape(NUM_INPUT_CLIPS, LTA_DIM, ZC_PAD)                    # (2, 2048, 128)

    b_fused = jnp.concatenate(b_list)[None, :]                             # (1, 108)
    b_fused = jnp.pad(b_fused, ((0, 0), (0, ZC_PAD - ZC))).astype(jnp.float32)

    params = {"head_wq": w_q, "head_scale": scale.astype(jnp.float32), "head_b": b_fused}
    return params, (w_list, b_list)


# ------------------------------ pure-JAX references ---------------------------
def reference_forward(w_list, b_list, feat_lta_middle):
    """Original float32 FinetuneLTA.decode() semantics."""
    bs = feat_lta_middle.shape[1]
    feat = jnp.transpose(feat_lta_middle.astype(jnp.float32), (1, 0, 2)).reshape(bs, IN_DIM)
    logits = jnp.stack([feat @ w.T + b for w, b in zip(w_list, b_list)], axis=1)
    sections = np.cumsum(NUM_CLASSES)[:-1].tolist()
    return tuple(jnp.split(logits, sections, axis=-1))


def reference_forward_dequant(params, feat_lta_middle):
    """Same math as the kernel (int8-dequant weights), in plain f32 JAX — tight check."""
    bs = feat_lta_middle.shape[1]
    feat = jnp.transpose(feat_lta_middle, (1, 0, 2)).reshape(bs, IN_DIM).astype(jnp.float32)
    w_deq = params["head_wq"].astype(jnp.float32).reshape(IN_DIM, ZC_PAD) * params["head_scale"]
    flat = feat @ w_deq + params["head_b"]
    out = flat[:, :ZC].reshape(bs, NUM_ACTIONS_TO_PREDICT, CLS_TOTAL)
    sections = np.cumsum(NUM_CLASSES)[:-1].tolist()
    return tuple(jnp.split(out, sections, axis=-1))


# ----------------------------------- main -------------------------------------
if __name__ == "__main__":
    key = jax.random.PRNGKey(0)
    k_param, k_feat = jax.random.split(key, 2)

    params, (w_list, b_list) = init_params(k_param)
    # stand-in for the frozen ForecastingEncoderDecoder middle features (seq-first, bf16)
    feat_lta_middle = jax.random.normal(
        k_feat, (NUM_INPUT_CLIPS, BATCH, LTA_DIM), jnp.float32
    ).astype(jnp.bfloat16)

    outs = forward(params, feat_lta_middle)
    outs = jax.block_until_ready(outs)

    refs_f32 = reference_forward(w_list, b_list, feat_lta_middle)
    refs_deq = reference_forward_dequant(params, feat_lta_middle)

    expected = [(BATCH, NUM_ACTIONS_TO_PREDICT, c) for c in NUM_CLASSES]
    got = [tuple(o.shape) for o in outs]
    assert got == expected, (got, expected)
    for o, r_f32, r_deq in zip(outs, refs_f32, refs_deq):
        assert bool(jnp.all(jnp.isfinite(o)))
        # tight: kernel matches its own int8-dequant math
        assert bool(jnp.allclose(o, r_deq, atol=5e-3, rtol=1e-3)), float(
            jnp.max(jnp.abs(o - r_deq))
        )
        # loose: int8 weights + bf16 activations vs the original f32 head
        assert bool(jnp.allclose(o, r_f32, atol=0.2, rtol=0.05)), float(
            jnp.max(jnp.abs(o - r_f32))
        )
    print("KERNEL_OK")
</pallas_src>

<mosaic_0001>
module attributes {stable_mosaic.version = 11 : i64} {
  func.func @fused_head_kernel(%arg0: memref<2x2x2048xbf16, #tpu.memory_space<vmem>>, %arg1: memref<2x2048x128xi8, #tpu.memory_space<vmem>>, %arg2: memref<1x128xf32, #tpu.memory_space<vmem>>, %arg3: memref<1x128xf32, #tpu.memory_space<vmem>>, %arg4: memref<2x128xf32, #tpu.memory_space<vmem>>) attributes {dimension_semantics = [], scalar_prefetch = 0 : i64, scratch_operands = 0 : i64, tpu.core_type = #tpu.core_type<tc>} {
    %c0 = arith.constant 0 : index
    %c0_0 = arith.constant 0 : index
    %c0_1 = arith.constant 0 : index
    %0 = vector.load %arg0[%c0, %c0_0, %c0_1] : memref<2x2x2048xbf16, #tpu.memory_space<vmem>>, vector<1x2x2048xbf16>
    %1 = vector.shape_cast %0 : vector<1x2x2048xbf16> to vector<2x2048xbf16>
    %c1 = arith.constant 1 : index
    %c0_2 = arith.constant 0 : index
    %c0_3 = arith.constant 0 : index
    %2 = vector.load %arg0[%c1, %c0_2, %c0_3] : memref<2x2x2048xbf16, #tpu.memory_space<vmem>>, vector<1x2x2048xbf16>
    %3 = vector.shape_cast %2 : vector<1x2x2048xbf16> to vector<2x2048xbf16>
    %c0_4 = arith.constant 0 : index
    %c0_5 = arith.constant 0 : index
    %c0_6 = arith.constant 0 : index
    %4 = vector.load %arg1[%c0_4, %c0_5, %c0_6] : memref<2x2048x128xi8, #tpu.memory_space<vmem>>, vector<1x2048x128xi8>
    %5 = vector.shape_cast %4 : vector<1x2048x128xi8> to vector<2048x128xi8>
    %6 = arith.sitofp %5 : vector<2048x128xi8> to vector<2048x128xbf16>
    %c1_7 = arith.constant 1 : index
    %c0_8 = arith.constant 0 : index
    %c0_9 = arith.constant 0 : index
    %7 = vector.load %arg1[%c1_7, %c0_8, %c0_9] : memref<2x2048x128xi8, #tpu.memory_space<vmem>>, vector<1x2048x128xi8>
    %8 = vector.shape_cast %7 : vector<1x2048x128xi8> to vector<2048x128xi8>
    %9 = arith.sitofp %8 : vector<2048x128xi8> to vector<2048x128xbf16>
    %cst = arith.constant dense<0.000000e+00> : vector<2x128xf32>
    %10 = tpu.matmul %1, %6, %cst {dimension_numbers = #tpu.dot_dimension_numbers<[1], [0], [0], [1], [0, 0, 1, 1], [], []>} : vector<2x2048xbf16>, vector<2048x128xbf16>, vector<2x128xf32> -> vector<2x128xf32>
    %cst_10 = arith.constant dense<0.000000e+00> : vector<2x128xf32>
    %11 = tpu.matmul %3, %9, %cst_10 {dimension_numbers = #tpu.dot_dimension_numbers<[1], [0], [0], [1], [0, 0, 1, 1], [], []>} : vector<2x2048xbf16>, vector<2048x128xbf16>, vector<2x128xf32> -> vector<2x128xf32>
    %12 = arith.addf %10, %11 : vector<2x128xf32>
    %c0_11 = arith.constant 0 : index
    %c0_12 = arith.constant 0 : index
    %13 = vector.load %arg2[%c0_11, %c0_12] : memref<1x128xf32, #tpu.memory_space<vmem>>, vector<1x128xf32>
    %14 = vector.broadcast %13 : vector<1x128xf32> to vector<2x128xf32>
    %15 = arith.mulf %12, %14 : vector<2x128xf32>
    %c0_13 = arith.constant 0 : index
    %c0_14 = arith.constant 0 : index
    %16 = vector.load %arg3[%c0_13, %c0_14] : memref<1x128xf32, #tpu.memory_space<vmem>>, vector<1x128xf32>
    %17 = vector.broadcast %16 : vector<1x128xf32> to vector<2x128xf32>
    %18 = arith.addf %15, %17 : vector<2x128xf32>
    %c0_15 = arith.constant 0 : index
    %c0_16 = arith.constant 0 : index
    %19 = vector.load %arg4[%c0_15, %c0_16] : memref<2x128xf32, #tpu.memory_space<vmem>>, vector<2x128xf32>
    tpu.vector_store %arg4[%c0_15, %c0_16], %18 {strides = array<i32>} : memref<2x128xf32, #tpu.memory_space<vmem>>, vector<2x128xf32>,
    return
  }
}

</mosaic_0001>

<llo_original>
// kernel: split.1
$region0: #{split.1}
  #allocation0 [shape = 'u32[2048]{0}', space=vmem, size = 0x2000, scoped, tag = 'scoped memory for split.1']
  #allocation1 [shape = 'u32[2048]{0}', space=vmem, size = 0x2000, scoped, tag = 'scoped memory for split.1']
  #allocation2 [shape = 'u32[2048]{0}', space=vmem, size = 0x2000, scoped, tag = 'scoped memory for split.1']
  #allocation3 [shape = 'u32[2048]{0}', space=vmem, size = 0x2000, scoped, tag = 'scoped memory for split.1']
  #allocation4 [shape = 'u32[2048]{0}', space=vmem, size = 0x2000, scoped, tag = 'scoped memory for split.1']
  #allocation5 [shape = 's32[1]{0}', space=sflag, size = 0x4, scoped, tag = 'scoped memory for split.1']
  %s0 = inlined_call_operand.vmem [shape: f32[2,3,36], index: 0, kind: input, shape index: {}]
  %s1 = inlined_call_operand.vmem [shape: f32[2,3,20], index: 1, kind: output, shape index: {}]
  %v2 = vld [vmem:[%s0] sm:$0x7]
  %v3 = vlaneseq
  %v4 = vand.u32 %v3, 127
  %vm5 = vcmp.lt.s32.totalorder %v4, 16
  %v6 = vsel %vm5, 0, %v2
  %7 = vrot.lane.b32.xlu0 %v6, 112
  %v8 = vpop.permute.xlu0 %7
  %9 = vst [vmem:[%s1] sm:$0xf] %v8
  %s10 = scalar_lea.vmem %s0, 4
  %v11 = vld [vmem:[%s10] sm:$0x7]
  %v12 = vlaneseq
  %v13 = vand.u32 %v12, 127
  %vm14 = vcmp.lt.s32.totalorder %v13, 16
  %v15 = vsel %vm14, 0, %v11
  %16 = vrot.lane.b32.xlu0 %v15, 112
  %v17 = vpop.permute.xlu0 %16
  %s18 = scalar_lea.vmem %s1, 4
  %19 = vst [vmem:[%s18] sm:$0xf] %v17

// kernel: forward.1
$region0: #{forward.1}
  #allocation0 [shape = 'u32[]', space=smem, size = 0x4, offset = 0x4, fixed_abs, tag = 'smem constant byte address 0x4 - core index']
  #allocation1 [shape = 'u32[144,128]{1,0:T(1,128)}', space=vmem, size = 0x12000, scoped, tag = 'internal scratch']
  %s0 = inlined_call_operand.hbm [shape: bf16[2,2,2048], index: 0, kind: input, shape index: {}]
  %s1 = inlined_call_operand.hbm [shape: s8[2,2048,128], index: 1, kind: input, shape index: {}]
  %s2 = inlined_call_operand.vmem [shape: f32[1,128], index: 2, kind: input, shape index: {}]
  %s3 = inlined_call_operand.hbm [shape: f32[1,128], index: 3, kind: input, shape index: {}]
  %s4 = inlined_call_operand.vmem [shape: f32[2,128], index: 4, kind: output, shape index: {}]
  %s5 = sld [smem:[#allocation0]]
  $region38: #{forward.1} parent=0
    _
  %s7 = ssub.s32 1, %s5
  %s8 = scalar_select 0, %s7, %s5
  $region1: #{forward.1} parent=0
    #allocation2 [shape = 'u8[16384]{0}', space=vmem, size = 0x4000, scoped, tag = 'input window, operand 0, single buffered']
    #allocation3 [shape = 's32[1]{0}', space=sflag, size = 0x4, scoped, tag = 'scoped memory for forward.1']
    #allocation4 [shape = 'u8[524288]{0}', space=vmem, size = 0x80000, scoped, tag = 'input window, operand 1, single buffered']
    #allocation5 [shape = 's32[1]{0}', space=sflag, size = 0x4, scoped, tag = 'scoped memory for forward.1']
    #allocation6 [shape = 'u8[512]{0}', space=vmem, size = 0x400, scoped, tag = 'input window, operand 3, single buffered']
    %9 = vsyncpa [#allocation3], 0
    %10 = vsyncpa [#allocation5], 0
    // Predicated region
    $region2: #{forward.1} parent=1 // pred_check
      _
    $region3: #{forward.1} parent=1 // pred_check_branch
      %12 = sbr.rel (0) target = $region5
    $region4: #{forward.1} parent=1 // pred_region
      %s14 = ssub.s32 512, 512
      %15 = vsyncadd [#allocation3], %s14
      %s16 = sshll.u32 [#allocation2], 4
      %s17 = int_to_ptr.vmem [resolvable:$true] %s16
      %22 = dma.hbm_to_vmem [thread:$0]  %s0, 512, %s17, [#allocation3], 256, 256, 16
    $region5: #{forward.1} parent=1 // pred_fallthru
      _
    // Predicated region
    $region6: #{forward.1} parent=1 // pred_check
      _
    $region7: #{forward.1} parent=1 // pred_check_branch
      %24 = sbr.rel (0) target = $region9
    $region8: #{forward.1} parent=1 // pred_region
      %s26 = ssub.s32 16384, 16384
      %27 = vsyncadd [#allocation5], %s26
      %s28 = sshll.u32 [#allocation4], 4
      %s29 = int_to_ptr.vmem [resolvable:$true] %s28
      %34 = dma.hbm_to_vmem [thread:$0]  %s1, 16384, %s29, [#allocation5], 128, 128, 8
    $region9: #{forward.1} parent=1 // pred_fallthru
      _
    // Predicated region
    $region10: #{forward.1} parent=1 // pred_check
      _
    $region11: #{forward.1} parent=1 // pred_check_branch
      %36 = sbr.rel (0) target = $region13
    $region12: #{forward.1} parent=1 // pred_region
      _
    $region13: #{forward.1} parent=1 // pred_fallthru
      _
    // Predicated region
    $region14: #{forward.1} parent=1 // pred_check
      _
    $region15: #{forward.1} parent=1 // pred_check_branch
      %38 = sbr.rel (0) target = $region17
    $region16: #{forward.1} parent=1 // pred_region
      %s40 = ssub.s32 16, 16
      %41 = vsyncadd [#allocation5], %s40
      %s43 = sshll.u32 [#allocation6], 4
      %s44 = int_to_ptr.vmem [resolvable:$true] %s43
      %46 = dma.hbm_to_vmem [thread:$0]  %s3, 16, %s44, [#allocation5]
    $region17: #{forward.1} parent=1 // pred_fallthru
      _
    // Predicated region
    $region18: #{forward.1} parent=1 // pred_check
      _
    $region19: #{forward.1} parent=1 // pred_check_branch
      %48 = sbr.rel (0) target = $region21
    $region20: #{forward.1} parent=1 // pred_region
      %49 = dma.done [#allocation3], 512
    $region21: #{forward.1} parent=1 // pred_fallthru
      _
    // Predicated region
    $region22: #{forward.1} parent=1 // pred_check
      _
    $region23: #{forward.1} parent=1 // pred_check_branch
      %51 = sbr.rel (0) target = $region25
    $region24: #{forward.1} parent=1 // pred_region
      %52 = dma.done [#allocation5], 16384
    $region25: #{forward.1} parent=1 // pred_fallthru
      _
    // Predicated region
    $region26: #{forward.1} parent=1 // pred_check
      _
    $region27: #{forward.1} parent=1 // pred_check_branch
      %54 = sbr.rel (0) target = $region29
    $region28: #{forward.1} parent=1 // pred_region
      %55 = dma.done [#allocation5], 16
    $region29: #{forward.1} parent=1 // pred_fallthru
      _
    %v57 = vld [vmem:[#allocation2] sm:$0xff]
    %v58 = vld [vmem:[#allocation2 + $0x8] sm:$0xff]
    %s59 = scalar_lea.vmem [#allocation2], 16
    %v60 = vld [vmem:[%s59] sm:$0xff]
    %v61 = vld [vmem:[%s59 + $0x8] sm:$0xff]
    %v62 = vld [vmem:[#allocation4] sm:$0xff]
    %v63 = vld [vmem:[#allocation4 + $0x8] sm:$0xff]
    %v64 = vld [vmem:[#allocation4 + $0x10] sm:$0xff]
    %v65 = vld [vmem:[#allocation4 + $0x18] sm:$0xff]
    %v66 = vld [vmem:[#allocation4 + $0x20] sm:$0xff]
    %v67 = vld [vmem:[#allocation4 + $0x28] sm:$0xff]
    %v68 = vld [vmem:[#allocation4 + $0x30] sm:$0xff]
    %v69 = vld [vmem:[#allocation4 + $0x38] sm:$0xff]
    %v70 = vld [vmem:[#allocation4 + $0x40] sm:$0xff]
    %v71 = vld [vmem:[#allocation4 + $0x48] sm:$0xff]
    %v72 = vld [vmem:[#allocation4 + $0x50] sm:$0xff]
    %v73 = vld [vmem:[#allocation4 + $0x58] sm:$0xff]
    %v74 = vld [vmem:[#allocation4 + $0x60] sm:$0xff]
    %v75 = vld [vmem:[#allocation4 + $0x68] sm:$0xff]
    %v76 = vld [vmem:[#allocation4 + $0x70] sm:$0xff]
    %v77 = vld [vmem:[#allocation4 + $0x78] sm:$0xff]
    %v78 = vld [vmem:[#allocation4 + $0x80] sm:$0xff]
    %v79 = vld [vmem:[#allocation4 + $0x88] sm:$0xff]
    %v80 = vld [vmem:[#allocation4 + $0x90] sm:$0xff]
    %v81 = vld [vmem:[#allocation4 + $0x98] sm:$0xff]
    %v82 = vld [vmem:[#allocation4 + $0xa0] sm:$0xff]
    %v83 = vld [vmem:[#allocation4 + $0xa8] sm:$0xff]
    %v84 = vld [vmem:[#allocation4 + $0xb0] sm:$0xff]
    %v85 = vld [vmem:[#allocation4 + $0xb8] sm:$0xff]
    %v86 = vld [vmem:[#allocation4 + $0xc0] sm:$0xff]
    %v87 = vld [vmem:[#allocation4 + $0xc8] sm:$0xff]
    %v88 = vld [vmem:[#allocation4 + $0xd0] sm:$0xff]
    %v89 = vld [vmem:[#allocation4 + $0xd8] sm:$0xff]
    %v90 = vld [vmem:[#allocation4 + $0xe0] sm:$0xff]
    %v91 = vld [vmem:[#allocation4 + $0xe8] sm:$0xff]
    %v92 = vld [vmem:[#allocation4 + $0xf0] sm:$0xff]
    %v93 = vld [vmem:[#allocation4 + $0xf8] sm:$0xff]
    %v94 = vld [vmem:[#allocation4 + $0x100] sm:$0xff]
    %v95 = vld [vmem:[#allocation4 + $0x108] sm:$0xff]
    %v96 = vld [vmem:[#allocation4 + $0x110] sm:$0xff]
    %v97 = vld [vmem:[#allocation4 + $0x118] sm:$0xff]
    %v98 = vld [vmem:[#allocation4 + $0x120] sm:$0xff]
    %v99 = vld [vmem:[#allocation4 + $0x128] sm:$0xff]
    %v100 = vld [vmem:[#allocation4 + $0x130] sm:$0xff]
    %v101 = vld [vmem:[#allocation4 + $0x138] sm:$0xff]
    %v102 = vld [vmem:[#allocation4 + $0x140] sm:$0xff]
    %v103 = vld [vmem:[#allocation4 + $0x148] sm:$0xff]
    %v104 = vld [vmem:[#allocation4 + $0x150] sm:$0xff]
    %v105 = vld [vmem:[#allocation4 + $0x158] sm:$0xff]
    %v106 = vld [vmem:[#allocation4 + $0x160] sm:$0xff]
    %v107 = vld [vmem:[#allocation4 + $0x168] sm:$0xff]
    %v108 = vld [vmem:[#allocation4 + $0x170] sm:$0xff]
    %v109 = vld [vmem:[#allocation4 + $0x178] sm:$0xff]
    %v110 = vld [vmem:[#allocation4 + $0x180] sm:$0xff]
    %v111 = vld [vmem:[#allocation4 + $0x188] sm:$0xff]
    %v112 = vld [vmem:[#allocation4 + $0x190] sm:$0xff]
    %v113 = vld [vmem:[#allocation4 + $0x198] sm:$0xff]
    %v114 = vld [vmem:[#allocation4 + $0x1a0] sm:$0xff]
    %v115 = vld [vmem:[#allocation4 + $0x1a8] sm:$0xff]
    %v116 = vld [vmem:[#allocation4 + $0x1b0] sm:$0xff]
    %v117 = vld [vmem:[#allocation4 + $0x1b8] sm:$0xff]
    %v118 = vld [vmem:[#allocation4 + $0x1c0] sm:$0xff]
    %v119 = vld [vmem:[#allocation4 + $0x1c8] sm:$0xff]
    %v120 = vld [vmem:[#allocation4 + $0x1d0] sm:$0xff]
    %v121 = vld [vmem:[#allocation4 + $0x1d8] sm:$0xff]
    %v122 = vld [vmem:[#allocation4 + $0x1e0] sm:$0xff]
    %v123 = vld [vmem:[#allocation4 + $0x1e8] sm:$0xff]
    %v124 = vld [vmem:[#allocation4 + $0x1f0] sm:$0xff]
    %v125 = vld [vmem:[#allocation4 + $0x1f8] sm:$0xff]
    %v126 = vunpack.c.l.s8.bf16 %v62
    %v127 = vunpack.c.h.s8.bf16 %v62
    %v128 = vunpack.c.l.s8.bf16 %v63
    %v129 = vunpack.c.h.s8.bf16 %v63
    %v130 = vunpack.c.l.s8.bf16 %v64
    %v131 = vunpack.c.h.s8.bf16 %v64
    %v132 = vunpack.c.l.s8.bf16 %v65
    %v133 = vunpack.c.h.s8.bf16 %v65
    %v134 = vunpack.c.l.s8.bf16 %v66
    %v135 = vunpack.c.h.s8.bf16 %v66
    %v136 = vunpack.c.l.s8.bf16 %v67
    %v137 = vunpack.c.h.s8.bf16 %v67
    %v138 = vunpack.c.l.s8.bf16 %v68
    %v139 = vunpack.c.h.s8.bf16 %v68
    %v140 = vunpack.c.l.s8.bf16 %v69
    %v141 = vunpack.c.h.s8.bf16 %v69
    %v142 = vunpack.c.l.s8.bf16 %v70
    %v143 = vunpack.c.h.s8.bf16 %v70
    %v144 = vunpack.c.l.s8.bf16 %v71
    %v145 = vunpack.c.h.s8.bf16 %v71
    %v146 = vunpack.c.l.s8.bf16 %v72
    %v147 = vunpack.c.h.s8.bf16 %v72
    %v148 = vunpack.c.l.s8.bf16 %v73
    %v149 = vunpack.c.h.s8.bf16 %v73
    %v150 = vunpack.c.l.s8.bf16 %v74
    %v151 = vunpack.c.h.s8.bf16 %v74
    %v152 = vunpack.c.l.s8.bf16 %v75
    %v153 = vunpack.c.h.s8.bf16 %v75
    %v154 = vunpack.c.l.s8.bf16 %v76
    %v155 = vunpack.c.h.s8.bf16 %v76
    %v156 = vunpack.c.l.s8.bf16 %v77
    %v157 = vunpack.c.h.s8.bf16 %v77
    %v158 = vunpack.c.l.s8.bf16 %v78
    %v159 = vunpack.c.h.s8.bf16 %v78
    %v160 = vunpack.c.l.s8.bf16 %v79
    %v161 = vunpack.c.h.s8.bf16 %v79
    %v162 = vunpack.c.l.s8.bf16 %v80
    %v163 = vunpack.c.h.s8.bf16 %v80
    %v164 = vunpack.c.l.s8.bf16 %v81
    %v165 = vunpack.c.h.s8.bf16 %v81
    %v166 = vunpack.c.l.s8.bf16 %v82
    %v167 = vunpack.c.h.s8.bf16 %v82
    %v168 = vunpack.c.l.s8.bf16 %v83
    %v169 = vunpack.c.h.s8.bf16 %v83
    %v170 = vunpack.c.l.s8.bf16 %v84
    %v171 = vunpack.c.h.s8.bf16 %v84
    %v172 = vunpack.c.l.s8.bf16 %v85
    %v173 = vunpack.c.h.s8.bf16 %v85
    %v174 = vunpack.c.l.s8.bf16 %v86
    %v175 = vunpack.c.h.s8.bf16 %v86
    %v176 = vunpack.c.l.s8.bf16 %v87
    %v177 = vunpack.c.h.s8.bf16 %v87
    %v178 = vunpack.c.l.s8.bf16 %v88
    %v179 = vunpack.c.h.s8.bf16 %v88
    %v180 = vunpack.c.l.s8.bf16 %v89
    %v181 = vunpack.c.h.s8.bf16 %v89
    %v182 = vunpack.c.l.s8.bf16 %v90
    %v183 = vunpack.c.h.s8.bf16 %v90
    %v184 = vunpack.c.l.s8.bf16 %v91
    %v185 = vunpack.c.h.s8.bf16 %v91
    %v186 = vunpack.c.l.s8.bf16 %v92
    %v187 = vunpack.c.h.s8.bf16 %v92
    %v188 = vunpack.c.l.s8.bf16 %v93
    %v189 = vunpack.c.h.s8.bf16 %v93
    %v190 = vunpack.c.l.s8.bf16 %v94
    %v191 = vunpack.c.h.s8.bf16 %v94
    %v192 = vunpack.c.l.s8.bf16 %v95
    %v193 = vunpack.c.h.s8.bf16 %v95
    %v194 = vunpack.c.l.s8.bf16 %v96
    %v195 = vunpack.c.h.s8.bf16 %v96
    %v196 = vunpack.c.l.s8.bf16 %v97
    %v197 = vunpack.c.h.s8.bf16 %v97
    %v198 = vunpack.c.l.s8.bf16 %v98
    %v199 = vunpack.c.h.s8.bf16 %v98
    %v200 = vunpack.c.l.s8.bf16 %v99
    %v201 = vunpack.c.h.s8.bf16 %v99
    %v202 = vunpack.c.l.s8.bf16 %v100
    %v203 = vunpack.c.h.s8.bf16 %v100
    %v204 = vunpack.c.l.s8.bf16 %v101
    %v205 = vunpack.c.h.s8.bf16 %v101
    %v206 = vunpack.c.l.s8.bf16 %v102
    %v207 = vunpack.c.h.s8.bf16 %v102
    %v208 = vunpack.c.l.s8.bf16 %v103
    %v209 = vunpack.c.h.s8.bf16 %v103
    %v210 = vunpack.c.l.s8.bf16 %v104
    %v211 = vunpack.c.h.s8.bf16 %v104
    %v212 = vunpack.c.l.s8.bf16 %v105
    %v213 = vunpack.c.h.s8.bf16 %v105
    %v214 = vunpack.c.l.s8.bf16 %v106
    %v215 = vunpack.c.h.s8.bf16 %v106
    %v216 = vunpack.c.l.s8.bf16 %v107
    %v217 = vunpack.c.h.s8.bf16 %v107
    %v218 = vunpack.c.l.s8.bf16 %v108
    %v219 = vunpack.c.h.s8.bf16 %v108
    %v220 = vunpack.c.l.s8.bf16 %v109
    %v221 = vunpack.c.h.s8.bf16 %v109
    %v222 = vunpack.c.l.s8.bf16 %v110
    %v223 = vunpack.c.h.s8.bf16 %v110
    %v224 = vunpack.c.l.s8.bf16 %v111
    %v225 = vunpack.c.h.s8.bf16 %v111
    %v226 = vunpack.c.l.s8.bf16 %v112
    %v227 = vunpack.c.h.s8.bf16 %v112
    %v228 = vunpack.c.l.s8.bf16 %v113
    %v229 = vunpack.c.h.s8.bf16 %v113
    %v230 = vunpack.c.l.s8.bf16 %v114
    %v231 = vunpack.c.h.s8.bf16 %v114
    %v232 = vunpack.c.l.s8.bf16 %v115
    %v233 = vunpack.c.h.s8.bf16 %v115
    %v234 = vunpack.c.l.s8.bf16 %v116
    %v235 = vunpack.c.h.s8.bf16 %v116
    %v236 = vunpack.c.l.s8.bf16 %v117
    %v237 = vunpack.c.h.s8.bf16 %v117
    %v238 = vunpack.c.l.s8.bf16 %v118
    %v239 = vunpack.c.h.s8.bf16 %v118
    %v240 = vunpack.c.l.s8.bf16 %v119
    %v241 = vunpack.c.h.s8.bf16 %v119
    %v242 = vunpack.c.l.s8.bf16 %v120
    %v243 = vunpack.c.h.s8.bf16 %v120
    %v244 = vunpack.c.l.s8.bf16 %v121
    %v245 = vunpack.c.h.s8.bf16 %v121
    %v246 = vunpack.c.l.s8.bf16 %v122
    %v247 = vunpack.c.h.s8.bf16 %v122
    %v248 = vunpack.c.l.s8.bf16 %v123
    %v249 = vunpack.c.h.s8.bf16 %v123
    %v250 = vunpack.c.l.s8.bf16 %v124
    %v251 = vunpack.c.h.s8.bf16 %v124
    %v252 = vunpack.c.l.s8.bf16 %v125
    %v253 = vunpack.c.h.s8.bf16 %v125
    %s254 = scalar_lea.vmem [#allocation4], 512
    %v255 = vld [vmem:[%s254] sm:$0xff]
    %v256 = vld [vmem:[%s254 + $0x8] sm:$0xff]
    %v257 = vld [vmem:[%s254 + $0x10] sm:$0xff]
    %v258 = vld [vmem:[%s254 + $0x18] sm:$0xff]
    %v259 = vld [vmem:[%s254 + $0x20] sm:$0xff]
    %v260 = vld [vmem:[%s254 + $0x28] sm:$0xff]
    %v261 = vld [vmem:[%s254 + $0x30] sm:$0xff]
    %v262 = vld [vmem:[%s254 + $0x38] sm:$0xff]
    %v263 = vld [vmem:[%s254 + $0x40] sm:$0xff]
    %v264 = vld [vmem:[%s254 + $0x48] sm:$0xff]
    %v265 = vld [vmem:[%s254 + $0x50] sm:$0xff]
    %v266 = vld [vmem:[%s254 + $0x58] sm:$0xff]
    %v267 = vld [vmem:[%s254 + $0x60] sm:$0xff]
    %v268 = vld [vmem:[%s254 + $0x68] sm:$0xff]
    %v269 = vld [vmem:[%s254 + $0x70] sm:$0xff]
    %v270 = vld [vmem:[%s254 + $0x78] sm:$0xff]
    %v271 = vld [vmem:[%s254 + $0x80] sm:$0xff]
    %v272 = vld [vmem:[%s254 + $0x88] sm:$0xff]
    %v273 = vld [vmem:[%s254 + $0x90] sm:$0xff]
    %v274 = vld [vmem:[%s254 + $0x98] sm:$0xff]
    %v275 = vld [vmem:[%s254 + $0xa0] sm:$0xff]
    %v276 = vld [vmem:[%s254 + $0xa8] sm:$0xff]
    %v277 = vld [vmem:[%s254 + $0xb0] sm:$0xff]
    %v278 = vld [vmem:[%s254 + $0xb8] sm:$0xff]
    %v279 = vld [vmem:[%s254 + $0xc0] sm:$0xff]
    %v280 = vld [vmem:[%s254 + $0xc8] sm:$0xff]
    %v281 = vld [vmem:[%s254 + $0xd0] sm:$0xff]
    %v282 = vld [vmem:[%s254 + $0xd8] sm:$0xff]
    %v283 = vld [vmem:[%s254 + $0xe0] sm:$0xff]
    %v284 = vld [vmem:[%s254 + $0xe8] sm:$0xff]
    %v285 = vld [vmem:[%s254 + $0xf0] sm:$0xff]
    %v286 = vld [vmem:[%s254 + $0xf8] sm:$0xff]
    %v287 = vld [vmem:[%s254 + $0x100] sm:$0xff]
    %v288 = vld [vmem:[%s254 + $0x108] sm:$0xff]
    %v289 = vld [vmem:[%s254 + $0x110] sm:$0xff]
    %v290 = vld [vmem:[%s254 + $0x118] sm:$0xff]
    %v291 = vld [vmem:[%s254 + $0x120] sm:$0xff]
    %v292 = vld [vmem:[%s254 + $0x128] sm:$0xff]
    %v293 = vld [vmem:[%s254 + $0x130] sm:$0xff]
    %v294 = vld [vmem:[%s254 + $0x138] sm:$0xff]
    %v295 = vld [vmem:[%s254 + $0x140] sm:$0xff]
    %v296 = vld [vmem:[%s254 + $0x148] sm:$0xff]
    %v297 = vld [vmem:[%s254 + $0x150] sm:$0xff]
    %v298 = vld [vmem:[%s254 + $0x158] sm:$0xff]
    %v299 = vld [vmem:[%s254 + $0x160] sm:$0xff]
    %v300 = vld [vmem:[%s254 + $0x168] sm:$0xff]
    %v301 = vld [vmem:[%s254 + $0x170] sm:$0xff]
    %v302 = vld [vmem:[%s254 + $0x178] sm:$0xff]
    %v303 = vld [vmem:[%s254 + $0x180] sm:$0xff]
    %v304 = vld [vmem:[%s254 + $0x188] sm:$0xff]
    %v305 = vld [vmem:[%s254 + $0x190] sm:$0xff]
    %v306 = vld [vmem:[%s254 + $0x198] sm:$0xff]
    %v307 = vld [vmem:[%s254 + $0x1a0] sm:$0xff]
    %v308 = vld [vmem:[%s254 + $0x1a8] sm:$0xff]
    %v309 = vld [vmem:[%s254 + $0x1b0] sm:$0xff]
    %v310 = vld [vmem:[%s254 + $0x1b8] sm:$0xff]
    %v311 = vld [vmem:[%s254 + $0x1c0] sm:$0xff]
    %v312 = vld [vmem:[%s254 + $0x1c8] sm:$0xff]
    %v313 = vld [vmem:[%s254 + $0x1d0] sm:$0xff]
    %v314 = vld [vmem:[%s254 + $0x1d8] sm:$0xff]
    %v315 = vld [vmem:[%s254 + $0x1e0] sm:$0xff]
    %v316 = vld [vmem:[%s254 + $0x1e8] sm:$0xff]
    %v317 = vld [vmem:[%s254 + $0x1f0] sm:$0xff]
    %v318 = vld [vmem:[%s254 + $0x1f8] sm:$0xff]
    %v319 = vunpack.c.l.s8.bf16 %v255
    %v320 = vunpack.c.h.s8.bf16 %v255
    %v321 = vunpack.c.l.s8.bf16 %v256
    %v322 = vunpack.c.h.s8.bf16 %v256
    %v323 = vunpack.c.l.s8.bf16 %v257
    %v324 = vunpack.c.h.s8.bf16 %v257
    %v325 = vunpack.c.l.s8.bf16 %v258
    %v326 = vunpack.c.h.s8.bf16 %v258
    %v327 = vunpack.c.l.s8.bf16 %v259
    %v328 = vunpack.c.h.s8.bf16 %v259
    %v329 = vunpack.c.l.s8.bf16 %v260
    %v330 = vunpack.c.h.s8.bf16 %v260
    %v331 = vunpack.c.l.s8.bf16 %v261
    %v332 = vunpack.c.h.s8.bf16 %v261
    %v333 = vunpack.c.l.s8.bf16 %v262
    %v334 = vunpack.c.h.s8.bf16 %v262
    %v335 = vunpack.c.l.s8.bf16 %v263
    %v336 = vunpack.c.h.s8.bf16 %v263
    %v337 = vunpack.c.l.s8.bf16 %v264
    %v338 = vunpack.c.h.s8.bf16 %v264
    %v339 = vunpack.c.l.s8.bf16 %v265
    %v340 = vunpack.c.h.s8.bf16 %v265
    %v341 = vunpack.c.l.s8.bf16 %v266
    %v342 = vunpack.c.h.s8.bf16 %v266
    %v343 = vunpack.c.l.s8.bf16 %v267
    %v344 = vunpack.c.h.s8.bf16 %v267
    %v345 = vunpack.c.l.s8.bf16 %v268
    %v346 = vunpack.c.h.s8.bf16 %v268
    %v347 = vunpack.c.l.s8.bf16 %v269
    %v348 = vunpack.c.h.s8.bf16 %v269
    %v349 = vunpack.c.l.s8.bf16 %v270
    %v350 = vunpack.c.h.s8.bf16 %v270
    %v351 = vunpack.c.l.s8.bf16 %v271
    %v352 = vunpack.c.h.s8.bf16 %v271
    %v353 = vunpack.c.l.s8.bf16 %v272
    %v354 = vunpack.c.h.s8.bf16 %v272
    %v355 = vunpack.c.l.s8.bf16 %v273
    %v356 = vunpack.c.h.s8.bf16 %v273
    %v357 = vunpack.c.l.s8.bf16 %v274
    %v358 = vunpack.c.h.s8.bf16 %v274
    %v359 = vunpack.c.l.s8.bf16 %v275
    %v360 = vunpack.c.h.s8.bf16 %v275
    %v361 = vunpack.c.l.s8.bf16 %v276
    %v362 = vunpack.c.h.s8.bf16 %v276
    %v363 = vunpack.c.l.s8.bf16 %v277
    %v364 = vunpack.c.h.s8.bf16 %v277
    %v365 = vunpack.c.l.s8.bf16 %v278
    %v366 = vunpack.c.h.s8.bf16 %v278
    %v367 = vunpack.c.l.s8.bf16 %v279
    %v368 = vunpack.c.h.s8.bf16 %v279
    %v369 = vunpack.c.l.s8.bf16 %v280
    %v370 = vunpack.c.h.s8.bf16 %v280
    %v371 = vunpack.c.l.s8.bf16 %v281
    %v372 = vunpack.c.h.s8.bf16 %v281
    %v373 = vunpack.c.l.s8.bf16 %v282
    %v374 = vunpack.c.h.s8.bf16 %v282
    %v375 = vunpack.c.l.s8.bf16 %v283
    %v376 = vunpack.c.h.s8.bf16 %v283
    %v377 = vunpack.c.l.s8.bf16 %v284
    %v378 = vunpack.c.h.s8.bf16 %v284
    %v379 = vunpack.c.l.s8.bf16 %v285
    %v380 = vunpack.c.h.s8.bf16 %v285
    %v381 = vunpack.c.l.s8.bf16 %v286
    %v382 = vunpack.c.h.s8.bf16 %v286
    %v383 = vunpack.c.l.s8.bf16 %v287
    %v384 = vunpack.c.h.s8.bf16 %v287
    %v385 = vunpack.c.l.s8.bf16 %v288
    %v386 = vunpack.c.h.s8.bf16 %v288
    %v387 = vunpack.c.l.s8.bf16 %v289
    %v388 = vunpack.c.h.s8.bf16 %v289
    %v389 = vunpack.c.l.s8.bf16 %v290
    %v390 = vunpack.c.h.s8.bf16 %v290
    %v391 = vunpack.c.l.s8.bf16 %v291
    %v392 = vunpack.c.h.s8.bf16 %v291
    %v393 = vunpack.c.l.s8.bf16 %v292
    %v394 = vunpack.c.h.s8.bf16 %v292
    %v395 = vunpack.c.l.s8.bf16 %v293
    %v396 = vunpack.c.h.s8.bf16 %v293
    %v397 = vunpack.c.l.s8.bf16 %v294
    %v398 = vunpack.c.h.s8.bf16 %v294
    %v399 = vunpack.c.l.s8.bf16 %v295
    %v400 = vunpack.c.h.s8.bf16 %v295
    %v401 = vunpack.c.l.s8.bf16 %v296
    %v402 = vunpack.c.h.s8.bf16 %v296
    %v403 = vunpack.c.l.s8.bf16 %v297
    %v404 = vunpack.c.h.s8.bf16 %v297
    %v405 = vunpack.c.l.s8.bf16 %v298
    %v406 = vunpack.c.h.s8.bf16 %v298
    %v407 = vunpack.c.l.s8.bf16 %v299
    %v408 = vunpack.c.h.s8.bf16 %v299
    %v409 = vunpack.c.l.s8.bf16 %v300
    %v410 = vunpack.c.h.s8.bf16 %v300
    %v411 = vunpack.c.l.s8.bf16 %v301
    %v412 = vunpack.c.h.s8.bf16 %v301
    %v413 = vunpack.c.l.s8.bf16 %v302
    %v414 = vunpack.c.h.s8.bf16 %v302
    %v415 = vunpack.c.l.s8.bf16 %v303
    %v416 = vunpack.c.h.s8.bf16 %v303
    %v417 = vunpack.c.l.s8.bf16 %v304
    %v418 = vunpack.c.h.s8.bf16 %v304
    %v419 = vunpack.c.l.s8.bf16 %v305
    %v420 = vunpack.c.h.s8.bf16 %v305
    %v421 = vunpack.c.l.s8.bf16 %v306
    %v422 = vunpack.c.h.s8.bf16 %v306
    %v423 = vunpack.c.l.s8.bf16 %v307
    %v424 = vunpack.c.h.s8.bf16 %v307
    %v425 = vunpack.c.l.s8.bf16 %v308
    %v426 = vunpack.c.h.s8.bf16 %v308
    %v427 = vunpack.c.l.s8.bf16 %v309
    %v428 = vunpack.c.h.s8.bf16 %v309
    %v429 = vunpack.c.l.s8.bf16 %v310
    %v430 = vunpack.c.h.s8.bf16 %v310
    %v431 = vunpack.c.l.s8.bf16 %v311
    %v432 = vunpack.c.h.s8.bf16 %v311
    %v433 = vunpack.c.l.s8.bf16 %v312
    %v434 = vunpack.c.h.s8.bf16 %v312
    %v435 = vunpack.c.l.s8.bf16 %v313
    %v436 = vunpack.c.h.s8.bf16 %v313
    %v437 = vunpack.c.l.s8.bf16 %v314
    %v438 = vunpack.c.h.s8.bf16 %v314
    %v439 = vunpack.c.l.s8.bf16 %v315
    %v440 = vunpack.c.h.s8.bf16 %v315
    %v441 = vunpack.c.l.s8.bf16 %v316
    %v442 = vunpack.c.h.s8.bf16 %v316
    %v443 = vunpack.c.l.s8.bf16 %v317
    %v444 = vunpack.c.h.s8.bf16 %v317
    %v445 = vunpack.c.l.s8.bf16 %v318
    %v446 = vunpack.c.h.s8.bf16 %v318
    %v449 = vcombine.high %v60, %v60
    %v451 = vunpack.c.l.s4 1966171168
    %v452 = vunpack.c.0.s8 %v451
    %v453 = vlaneseq
    %v454 = vshrl.u32 %v453, 7
    %v455 = vsub.s32 %v452, %v454
    %v456 = vrot.slane %v60, %v455
    %v458 = vunpack.c.l.s4 1966171168
    %v459 = vunpack.c.0.s8 %v458
    %v460 = vlaneseq
    %v461 = vshrl.u32 %v460, 7
    %v462 = vsub.s32 %v459, %v461
    %v463 = vrot.slane %v449, %v462
    %v464 = vcombine.high %v456, %v456
    %v465 = vcombine.high %v463, %v463
    %v467 = vunpack.c.l.s4 1966171168
    %v468 = vunpack.c.0.s8 %v467
    %v469 = vlaneseq
    %v470 = vshrl.u32 %v469, 7
    %v471 = vsub.s32 %v468, %v470
    %v472 = vrot.slane %v456, %v471
    %v474 = vunpack.c.l.s4 1966171168
    %v475 = vunpack.c.0.s8 %v474
    %v476 = vlaneseq
    %v477 = vshrl.u32 %v476, 7
    %v478 = vsub.s32 %v475, %v477
    %v479 = vrot.slane %v463, %v478
    %v481 = vunpack.c.l.s4 1966171168
    %v482 = vunpack.c.0.s8 %v481
    %v483 = vlaneseq
    %v484 = vshrl.u32 %v483, 7
    %v485 = vsub.s32 %v482, %v484
    %v486 = vrot.slane %v464, %v485
    %v488 = vunpack.c.l.s4 1966171168
    %v489 = vunpack.c.0.s8 %v488
    %v490 = vlaneseq
    %v491 = vshrl.u32 %v490, 7
    %v492 = vsub.s32 %v489, %v491
    %v493 = vrot.slane %v465, %v492
    %v494 = vcombine.high %v472, %v472
    %v495 = vcombine.high %v479, %v479
    %v496 = vcombine.high %v486, %v486
    %v497 = vcombine.high %v493, %v493
    %v498 = vcombine.high %v61, %v61
    %v500 = vunpack.c.l.s4 1966171168
    %v501 = vunpack.c.0.s8 %v500
    %v502 = vlaneseq
    %v503 = vshrl.u32 %v502, 7
    %v504 = vsub.s32 %v501, %v503
    %v505 = vrot.slane %v61, %v504
    %v507 = vunpack.c.l.s4 1966171168
    %v508 = vunpack.c.0.s8 %v507
    %v509 = vlaneseq
    %v510 = vshrl.u32 %v509, 7
    %v511 = vsub.s32 %v508, %v510
    %v512 = vrot.slane %v498, %v511
    %v513 = vcombine.high %v505, %v505
    %v514 = vcombine.high %v512, %v512
    %v516 = vunpack.c.l.s4 1966171168
    %v517 = vunpack.c.0.s8 %v516
    %v518 = vlaneseq
    %v519 = vshrl.u32 %v518, 7
    %v520 = vsub.s32 %v517, %v519
    %v521 = vrot.slane %v505, %v520
    %v523 = vunpack.c.l.s4 1966171168
    %v524 = vunpack.c.0.s8 %v523
    %v525 = vlaneseq
    %v526 = vshrl.u32 %v525, 7
    %v527 = vsub.s32 %v524, %v526
    %v528 = vrot.slane %v512, %v527
    %v530 = vunpack.c.l.s4 1966171168
    %v531 = vunpack.c.0.s8 %v530
    %v532 = vlaneseq
    %v533 = vshrl.u32 %v532, 7
    %v534 = vsub.s32 %v531, %v533
    %v535 = vrot.slane %v513, %v534
    %v537 = vunpack.c.l.s4 1966171168
    %v538 = vunpack.c.0.s8 %v537
    %v539 = vlaneseq
    %v540 = vshrl.u32 %v539, 7
    %v541 = vsub.s32 %v538, %v540
    %v542 = vrot.slane %v514, %v541
    %v543 = vcombine.high %v521, %v521
    %v544 = vcombine.high %v528, %v528
    %v545 = vcombine.high %v535, %v535
    %v546 = vcombine.high %v542, %v542
    %563 = vmatprep.subr.bf16.mxu0 0
    %564 = vmatpush1.bf16.msra.mxu0 %v326
    %565 = vmatprep.subr.bf16.mxu0 0
    %566 = vmatpush1.bf16.msra.mxu0 %v325
    %567 = vmatprep.subr.bf16.mxu0 0
    %568 = vmatpush1.bf16.msra.mxu0 %v324
    %569 = vmatprep.subr.bf16.mxu0 0
    %570 = vmatpush1.bf16.msra.mxu0 %v323
    %571 = vmatprep.subr.bf16.mxu0 0
    %572 = vmatpush1.bf16.msra.mxu0 %v322
    %573 = vmatprep.subr.bf16.mxu0 0
    %574 = vmatpush1.bf16.msra.mxu0 %v321
    %575 = vmatprep.subr.bf16.mxu0 0
    %576 = vmatpush1.bf16.msra.mxu0 %v320
    %577 = vmatprep.subr.bf16.mxu0 0
    %578 = vmatpush1.bf16.msra.mxu0 %v319
    %579 = vmatprep.subr.bf16.mxu0 0
    %580 = vmatpush2.bf16.msra.mxu0 %v334
    %581 = vmatprep.subr.bf16.mxu0 0
    %582 = vmatpush2.bf16.msra.mxu0 %v333
    %583 = vmatprep.subr.bf16.mxu0 0
    %584 = vmatpush2.bf16.msra.mxu0 %v332
    %585 = vmatprep.subr.bf16.mxu0 0
    %586 = vmatpush2.bf16.msra.mxu0 %v331
    %587 = vmatprep.subr.bf16.mxu0 0
    %588 = vmatpush2.bf16.msra.mxu0 %v330
    %589 = vmatprep.subr.bf16.mxu0 0
    %590 = vmatpush2.bf16.msra.mxu0 %v329
    %591 = vmatprep.subr.bf16.mxu0 0
    %592 = vmatpush2.bf16.msra.mxu0 %v328
    %593 = vmatprep.subr.bf16.mxu0 0
    %594 = vmatpush2.bf16.msra.mxu0 %v327
    %595 = vmatprep.mubr.bf16.mxu0 %v486
    %596 = vmatmul.mubr.bf16.gmra.mxu0 %v472
    %v597 = vpop.f32.mrf.mxu0
    %v598 = vadd.f32 0.0, %v597
    %v599 = vpop.f32.mrf.mxu0
    %v600 = vpop.f32.mrf.mxu0
    %v601 = vpop.f32.mrf.mxu0
    %602 = vdwg.mxu0
    %603 = vmatprep.subr.bf16.mxu0 0
    %604 = vmatpush1.bf16.msra.mxu0 %v342
    %605 = vmatprep.subr.bf16.mxu0 0
    %606 = vmatpush1.bf16.msra.mxu0 %v341
    %607 = vmatprep.subr.bf16.mxu0 0
    %608 = vmatpush1.bf16.msra.mxu0 %v340
    %609 = vmatprep.subr.bf16.mxu0 0
    %610 = vmatpush1.bf16.msra.mxu0 %v339
    %611 = vmatprep.subr.bf16.mxu0 0
    %612 = vmatpush1.bf16.msra.mxu0 %v338
    %613 = vmatprep.subr.bf16.mxu0 0
    %614 = vmatpush1.bf16.msra.mxu0 %v337
    %615 = vmatprep.subr.bf16.mxu0 0
    %616 = vmatpush1.bf16.msra.mxu0 %v336
    %617 = vmatprep.subr.bf16.mxu0 0
    %618 = vmatpush1.bf16.msra.mxu0 %v335
    %619 = vmatprep.subr.bf16.mxu0 0
    %620 = vmatpush2.bf16.msra.mxu0 %v350
    %621 = vmatprep.subr.bf16.mxu0 0
    %622 = vmatpush2.bf16.msra.mxu0 %v349
    %623 = vmatprep.subr.bf16.mxu0 0
    %624 = vmatpush2.bf16.msra.mxu0 %v348
    %625 = vmatprep.subr.bf16.mxu0 0
    %626 = vmatpush2.bf16.msra.mxu0 %v347
    %627 = vmatprep.subr.bf16.mxu0 0
    %628 = vmatpush2.bf16.msra.mxu0 %v346
    %629 = vmatprep.subr.bf16.mxu0 0
    %630 = vmatpush2.bf16.msra.mxu0 %v345
    %631 = vmatprep.subr.bf16.mxu0 0
    %632 = vmatpush2.bf16.msra.mxu0 %v344
    %633 = vmatprep.subr.bf16.mxu0 0
    %634 = vmatpush2.bf16.msra.mxu0 %v343
    %635 = vmatprep.mubr.bf16.mxu0 %v496
    %636 = vmatmul.mubr.bf16.gmra.mxu0 %v494
    %v637 = vpop.f32.mrf.mxu0
    %v638 = vadd.f32 %v598, %v637
    %v639 = vpop.f32.mrf.mxu0
    %v640 = vpop.f32.mrf.mxu0
    %v641 = vpop.f32.mrf.mxu0
    %642 = vdwg.mxu0
    %643 = vmatprep.subr.bf16.mxu0 0
    %644 = vmatpush1.bf16.msra.mxu0 %v358
    %645 = vmatprep.subr.bf16.mxu0 0
    %646 = vmatpush1.bf16.msra.mxu0 %v357
    %647 = vmatprep.subr.bf16.mxu0 0
    %648 = vmatpush1.bf16.msra.mxu0 %v356
    %649 = vmatprep.subr.bf16.mxu0 0
    %650 = vmatpush1.bf16.msra.mxu0 %v355
    %651 = vmatprep.subr.bf16.mxu0 0
    %652 = vmatpush1.bf16.msra.mxu0 %v354
    %653 = vmatprep.subr.bf16.mxu0 0
    %654 = vmatpush1.bf16.msra.mxu0 %v353
    %655 = vmatprep.subr.bf16.mxu0 0
    %656 = vmatpush1.bf16.msra.mxu0 %v352
    %657 = vmatprep.subr.bf16.mxu0 0
    %658 = vmatpush1.bf16.msra.mxu0 %v351
    %659 = vmatprep.subr.bf16.mxu0 0
    %660 = vmatpush2.bf16.msra.mxu0 %v366
    %661 = vmatprep.subr.bf16.mxu0 0
    %662 = vmatpush2.bf16.msra.mxu0 %v365
    %663 = vmatprep.subr.bf16.mxu0 0
    %664 = vmatpush2.bf16.msra.mxu0 %v364
    %665 = vmatprep.subr.bf16.mxu0 0
    %666 = vmatpush2.bf16.msra.mxu0 %v363
    %667 = vmatprep.subr.bf16.mxu0 0
    %668 = vmatpush2.bf16.msra.mxu0 %v362
    %669 = vmatprep.subr.bf16.mxu0 0
    %670 = vmatpush2.bf16.msra.mxu0 %v361
    %671 = vmatprep.subr.bf16.mxu0 0
    %672 = vmatpush2.bf16.msra.mxu0 %v360
    %673 = vmatprep.subr.bf16.mxu0 0
    %674 = vmatpush2.bf16.msra.mxu0 %v359
    %675 = vmatprep.mubr.bf16.mxu0 %v493
    %676 = vmatmul.mubr.bf16.gmra.mxu0 %v479
    %v677 = vpop.f32.mrf.mxu0
    %v678 = vadd.f32 %v638, %v677
    %v679 = vpop.f32.mrf.mxu0
    %v680 = vpop.f32.mrf.mxu0
    %v681 = vpop.f32.mrf.mxu0
    %682 = vdwg.mxu0
    %683 = vmatprep.subr.bf16.mxu0 0
    %684 = vmatpush1.bf16.msra.mxu0 %v374
    %685 = vmatprep.subr.bf16.mxu0 0
    %686 = vmatpush1.bf16.msra.mxu0 %v373
    %687 = vmatprep.subr.bf16.mxu0 0
    %688 = vmatpush1.bf16.msra.mxu0 %v372
    %689 = vmatprep.subr.bf16.mxu0 0
    %690 = vmatpush1.bf16.msra.mxu0 %v371
    %691 = vmatprep.subr.bf16.mxu0 0
    %692 = vmatpush1.bf16.msra.mxu0 %v370
    %693 = vmatprep.subr.bf16.mxu0 0
    %694 = vmatpush1.bf16.msra.mxu0 %v369
    %695 = vmatprep.subr.bf16.mxu0 0
    %696 = vmatpush1.bf16.msra.mxu0 %v368
    %697 = vmatprep.subr.bf16.mxu0 0
    %698 = vmatpush1.bf16.msra.mxu0 %v367
    %699 = vmatprep.subr.bf16.mxu0 0
    %700 = vmatpush2.bf16.msra.mxu0 %v382
    %701 = vmatprep.subr.bf16.mxu0 0
    %702 = vmatpush2.bf16.msra.mxu0 %v381
    %703 = vmatprep.subr.bf16.mxu0 0
    %704 = vmatpush2.bf16.msra.mxu0 %v380
    %705 = vmatprep.subr.bf16.mxu0 0
    %706 = vmatpush2.bf16.msra.mxu0 %v379
    %707 = vmatprep.subr.bf16.mxu0 0
    %708 = vmatpush2.bf16.msra.mxu0 %v378
    %709 = vmatprep.subr.bf16.mxu0 0
    %710 = vmatpush2.bf16.msra.mxu0 %v377
    %711 = vmatprep.subr.bf16.mxu0 0
    %712 = vmatpush2.bf16.msra.mxu0 %v376
    %713 = vmatprep.subr.bf16.mxu0 0
    %714 = vmatpush2.bf16.msra.mxu0 %v375
    %715 = vmatprep.mubr.bf16.mxu0 %v497
    %716 = vmatmul.mubr.bf16.gmra.mxu0 %v495
    %v717 = vpop.f32.mrf.mxu0
    %v718 = vadd.f32 %v678, %v717
    %v719 = vpop.f32.mrf.mxu0
    %v720 = vpop.f32.mrf.mxu0
    %v721 = vpop.f32.mrf.mxu0
    %722 = vdwg.mxu0
    %723 = vmatprep.subr.bf16.mxu0 0
    %724 = vmatpush1.bf16.msra.mxu0 %v390
    %725 = vmatprep.subr.bf16.mxu0 0
    %726 = vmatpush1.bf16.msra.mxu0 %v389
    %727 = vmatprep.subr.bf16.mxu0 0
    %728 = vmatpush1.bf16.msra.mxu0 %v388
    %729 = vmatprep.subr.bf16.mxu0 0
    %730 = vmatpush1.bf16.msra.mxu0 %v387
    %731 = vmatprep.subr.bf16.mxu0 0
    %732 = vmatpush1.bf16.msra.mxu0 %v386
    %733 = vmatprep.subr.bf16.mxu0 0
    %734 = vmatpush1.bf16.msra.mxu0 %v385
    %735 = vmatprep.subr.bf16.mxu0 0
    %736 = vmatpush1.bf16.msra.mxu0 %v384
    %737 = vmatprep.subr.bf16.mxu0 0
    %738 = vmatpush1.bf16.msra.mxu0 %v383
    %739 = vmatprep.subr.bf16.mxu0 0
    %740 = vmatpush2.bf16.msra.mxu0 %v398
    %741 = vmatprep.subr.bf16.mxu0 0
    %742 = vmatpush2.bf16.msra.mxu0 %v397
    %743 = vmatprep.subr.bf16.mxu0 0
    %744 = vmatpush2.bf16.msra.mxu0 %v396
    %745 = vmatprep.subr.bf16.mxu0 0
    %746 = vmatpush2.bf16.msra.mxu0 %v395
    %747 = vmatprep.subr.bf16.mxu0 0
    %748 = vmatpush2.bf16.msra.mxu0 %v394
    %749 = vmatprep.subr.bf16.mxu0 0
    %750 = vmatpush2.bf16.msra.mxu0 %v393
    %751 = vmatprep.subr.bf16.mxu0 0
    %752 = vmatpush2.bf16.msra.mxu0 %v392
    %753 = vmatprep.subr.bf16.mxu0 0
    %754 = vmatpush2.bf16.msra.mxu0 %v391
    %755 = vmatprep.mubr.bf16.mxu0 %v535
    %756 = vmatmul.mubr.bf16.gmra.mxu0 %v521
    %v757 = vpop.f32.mrf.mxu0
    %v758 = vadd.f32 %v718, %v757
    %v759 = vpop.f32.mrf.mxu0
    %v760 = vpop.f32.mrf.mxu0
    %v761 = vpop.f32.mrf.mxu0
    %762 = vdwg.mxu0
    %763 = vmatprep.subr.bf16.mxu0 0
    %764 = vmatpush1.bf16.msra.mxu0 %v406
    %765 = vmatprep.subr.bf16.mxu0 0
    %766 = vmatpush1.bf16.msra.mxu0 %v405
    %767 = vmatprep.subr.bf16.mxu0 0
    %768 = vmatpush1.bf16.msra.mxu0 %v404
    %769 = vmatprep.subr.bf16.mxu0 0
    %770 = vmatpush1.bf16.msra.mxu0 %v403
    %771 = vmatprep.subr.bf16.mxu0 0
    %772 = vmatpush1.bf16.msra.mxu0 %v402
    %773 = vmatprep.subr.bf16.mxu0 0
    %774 = vmatpush1.bf16.msra.mxu0 %v401
    %775 = vmatprep.subr.bf16.mxu0 0
    %776 = vmatpush1.bf16.msra.mxu0 %v400
    %777 = vmatprep.subr.bf16.mxu0 0
    %778 = vmatpush1.bf16.msra.mxu0 %v399
    %779 = vmatprep.subr.bf16.mxu0 0
    %780 = vmatpush2.bf16.msra.mxu0 %v414
    %781 = vmatprep.subr.bf16.mxu0 0
    %782 = vmatpush2.bf16.msra.mxu0 %v413
    %783 = vmatprep.subr.bf16.mxu0 0
    %784 = vmatpush2.bf16.msra.mxu0 %v412
    %785 = vmatprep.subr.bf16.mxu0 0
    %786 = vmatpush2.bf16.msra.mxu0 %v411
    %787 = vmatprep.subr.bf16.mxu0 0
    %788 = vmatpush2.bf16.msra.mxu0 %v410
    %789 = vmatprep.subr.bf16.mxu0 0
    %790 = vmatpush2.bf16.msra.mxu0 %v409
    %791 = vmatprep.subr.bf16.mxu0 0
    %792 = vmatpush2.bf16.msra.mxu0 %v408
    %793 = vmatprep.subr.bf16.mxu0 0
    %794 = vmatpush2.bf16.msra.mxu0 %v407
    %795 = vmatprep.mubr.bf16.mxu0 %v545
    %796 = vmatmul.mubr.bf16.gmra.mxu0 %v543
    %v797 = vpop.f32.mrf.mxu0
    %v798 = vadd.f32 %v758, %v797
    %v799 = vpop.f32.mrf.mxu0
    %v800 = vpop.f32.mrf.mxu0
    %v801 = vpop.f32.mrf.mxu0
    %802 = vdwg.mxu0
    %803 = vmatprep.subr.bf16.mxu0 0
    %804 = vmatpush1.bf16.msra.mxu0 %v422
    %805 = vmatprep.subr.bf16.mxu0 0
    %806 = vmatpush1.bf16.msra.mxu0 %v421
    %807 = vmatprep.subr.bf16.mxu0 0
    %808 = vmatpush1.bf16.msra.mxu0 %v420
    %809 = vmatprep.subr.bf16.mxu0 0
    %810 = vmatpush1.bf16.msra.mxu0 %v419
    %811 = vmatprep.subr.bf16.mxu0 0
    %812 = vmatpush1.bf16.msra.mxu0 %v418
    %813 = vmatprep.subr.bf16.mxu0 0
    %814 = vmatpush1.bf16.msra.mxu0 %v417
    %815 = vmatprep.subr.bf16.mxu0 0
    %816 = vmatpush1.bf16.msra.mxu0 %v416
    %817 = vmatprep.subr.bf16.mxu0 0
    %818 = vmatpush1.bf16.msra.mxu0 %v415
    %819 = vmatprep.subr.bf16.mxu0 0
    %820 = vmatpush2.bf16.msra.mxu0 %v430
    %821 = vmatprep.subr.bf16.mxu0 0
    %822 = vmatpush2.bf16.msra.mxu0 %v429
    %823 = vmatprep.subr.bf16.mxu0 0
    %824 = vmatpush2.bf16.msra.mxu0 %v428
    %825 = vmatprep.subr.bf16.mxu0 0
    %826 = vmatpush2.bf16.msra.mxu0 %v427
    %827 = vmatprep.subr.bf16.mxu0 0
    %828 = vmatpush2.bf16.msra.mxu0 %v426
    %829 = vmatprep.subr.bf16.mxu0 0
    %830 = vmatpush2.bf16.msra.mxu0 %v425
    %831 = vmatprep.subr.bf16.mxu0 0
    %832 = vmatpush2.bf16.msra.mxu0 %v424
    %833 = vmatprep.subr.bf16.mxu0 0
    %834 = vmatpush2.bf16.msra.mxu0 %v423
    %835 = vmatprep.mubr.bf16.mxu0 %v542
    %836 = vmatmul.mubr.bf16.gmra.mxu0 %v528
    %v837 = vpop.f32.mrf.mxu0
    %v838 = vadd.f32 %v798, %v837
    %v839 = vpop.f32.mrf.mxu0
    %v840 = vpop.f32.mrf.mxu0
    %v841 = vpop.f32.mrf.mxu0
    %842 = vdwg.mxu0
    %843 = vmatprep.subr.bf16.mxu0 0
    %844 = vmatpush1.bf16.msra.mxu0 %v438
    %845 = vmatprep.subr.bf16.mxu0 0
    %846 = vmatpush1.bf16.msra.mxu0 %v437
    %847 = vmatprep.subr.bf16.mxu0 0
    %848 = vmatpush1.bf16.msra.mxu0 %v436
    %849 = vmatprep.subr.bf16.mxu0 0
    %850 = vmatpush1.bf16.msra.mxu0 %v435
    %851 = vmatprep.subr.bf16.mxu0 0
    %852 = vmatpush1.bf16.msra.mxu0 %v434
    %853 = vmatprep.subr.bf16.mxu0 0
    %854 = vmatpush1.bf16.msra.mxu0 %v433
    %855 = vmatprep.subr.bf16.mxu0 0
    %856 = vmatpush1.bf16.msra.mxu0 %v432
    %857 = vmatprep.subr.bf16.mxu0 0
    %858 = vmatpush1.bf16.msra.mxu0 %v431
    %859 = vmatprep.subr.bf16.mxu0 0
    %860 = vmatpush2.bf16.msra.mxu0 %v446
    %861 = vmatprep.subr.bf16.mxu0 0
    %862 = vmatpush2.bf16.msra.mxu0 %v445
    %863 = vmatprep.subr.bf16.mxu0 0
    %864 = vmatpush2.bf16.msra.mxu0 %v444
    %865 = vmatprep.subr.bf16.mxu0 0
    %866 = vmatpush2.bf16.msra.mxu0 %v443
    %867 = vmatprep.subr.bf16.mxu0 0
    %868 = vmatpush2.bf16.msra.mxu0 %v442
    %869 = vmatprep.subr.bf16.mxu0 0
    %870 = vmatpush2.bf16.msra.mxu0 %v441
    %871 = vmatprep.subr.bf16.mxu0 0
    %872 = vmatpush2.bf16.msra.mxu0 %v440
    %873 = vmatprep.subr.bf16.mxu0 0
    %874 = vmatpush2.bf16.msra.mxu0 %v439
    %875 = vmatprep.mubr.bf16.mxu0 %v546
    %876 = vmatmul.mubr.bf16.gmra.mxu0 %v544
    %v877 = vpop.f32.mrf.mxu0
    %v878 = vadd.f32 %v838, %v877
    %v879 = vpop.f32.mrf.mxu0
    %v880 = vpop.f32.mrf.mxu0
    %v881 = vpop.f32.mrf.mxu0
    %882 = vdwg.mxu0
    %v885 = vcombine.high %v57, %v57
    %v887 = vunpack.c.l.s4 1966171168
    %v888 = vunpack.c.0.s8 %v887
    %v889 = vlaneseq
    %v890 = vshrl.u32 %v889, 7
    %v891 = vsub.s32 %v888, %v890
    %v892 = vrot.slane %v57, %v891
    %v894 = vunpack.c.l.s4 1966171168
    %v895 = vunpack.c.0.s8 %v894
    %v896 = vlaneseq
    %v897 = vshrl.u32 %v896, 7
    %v898 = vsub.s32 %v895, %v897
    %v899 = vrot.slane %v885, %v898
    %v900 = vcombine.high %v892, %v892
    %v901 = vcombine.high %v899, %v899
    %v903 = vunpack.c.l.s4 1966171168
    %v904 = vunpack.c.0.s8 %v903
    %v905 = vlaneseq
    %v906 = vshrl.u32 %v905, 7
    %v907 = vsub.s32 %v904, %v906
    %v908 = vrot.slane %v892, %v907
    %v910 = vunpack.c.l.s4 1966171168
    %v911 = vunpack.c.0.s8 %v910
    %v912 = vlaneseq
    %v913 = vshrl.u32 %v912, 7
    %v914 = vsub.s32 %v911, %v913
    %v915 = vrot.slane %v899, %v914
    %v917 = vunpack.c.l.s4 1966171168
    %v918 = vunpack.c.0.s8 %v917
    %v919 = vlaneseq
    %v920 = vshrl.u32 %v919, 7
    %v921 = vsub.s32 %v918, %v920
    %v922 = vrot.slane %v900, %v921
    %v924 = vunpack.c.l.s4 1966171168
    %v925 = vunpack.c.0.s8 %v924
    %v926 = vlaneseq
    %v927 = vshrl.u32 %v926, 7
    %v928 = vsub.s32 %v925, %v927
    %v929 = vrot.slane %v901, %v928
    %v930 = vcombine.high %v908, %v908
    %v931 = vcombine.high %v915, %v915
    %v932 = vcombine.high %v922, %v922
    %v933 = vcombine.high %v929, %v929
    %v934 = vcombine.high %v58, %v58
    %v936 = vunpack.c.l.s4 1966171168
    %v937 = vunpack.c.0.s8 %v936
    %v938 = vlaneseq
    %v939 = vshrl.u32 %v938, 7
    %v940 = vsub.s32 %v937, %v939
    %v941 = vrot.slane %v58, %v940
    %v943 = vunpack.c.l.s4 1966171168
    %v944 = vunpack.c.0.s8 %v943
    %v945 = vlaneseq
    %v946 = vshrl.u32 %v945, 7
    %v947 = vsub.s32 %v944, %v946
    %v948 = vrot.slane %v934, %v947
    %v949 = vcombine.high %v941, %v941
    %v950 = vcombine.high %v948, %v948
    %v952 = vunpack.c.l.s4 1966171168
    %v953 = vunpack.c.0.s8 %v952
    %v954 = vlaneseq
    %v955 = vshrl.u32 %v954, 7
    %v956 = vsub.s32 %v953, %v955
    %v957 = vrot.slane %v941, %v956
    %v959 = vunpack.c.l.s4 1966171168
    %v960 = vunpack.c.0.s8 %v959
    %v961 = vlaneseq
    %v962 = vshrl.u32 %v961, 7
    %v963 = vsub.s32 %v960, %v962
    %v964 = vrot.slane %v948, %v963
    %v966 = vunpack.c.l.s4 1966171168
    %v967 = vunpack.c.0.s8 %v966
    %v968 = vlaneseq
    %v969 = vshrl.u32 %v968, 7
    %v970 = vsub.s32 %v967, %v969
    %v971 = vrot.slane %v949, %v970
    %v973 = vunpack.c.l.s4 1966171168
    %v974 = vunpack.c.0.s8 %v973
    %v975 = vlaneseq
    %v976 = vshrl.u32 %v975, 7
    %v977 = vsub.s32 %v974, %v976
    %v978 = vrot.slane %v950, %v977
    %v979 = vcombine.high %v957, %v957
    %v980 = vcombine.high %v964, %v964
    %v981 = vcombine.high %v971, %v971
    %v982 = vcombine.high %v978, %v978
    %999 = vmatprep.subr.bf16.mxu0 0
    %1000 = vmatpush1.bf16.msra.mxu0 %v133
    %1001 = vmatprep.subr.bf16.mxu0 0
    %1002 = vmatpush1.bf16.msra.mxu0 %v132
    %1003 = vmatprep.subr.bf16.mxu0 0
    %1004 = vmatpush1.bf16.msra.mxu0 %v131
    %1005 = vmatprep.subr.bf16.mxu0 0
    %1006 = vmatpush1.bf16.msra.mxu0 %v130
    %1007 = vmatprep.subr.bf16.mxu0 0
    %1008 = vmatpush1.bf16.msra.mxu0 %v129
    %1009 = vmatprep.subr.bf16.mxu0 0
    %1010 = vmatpush1.bf16.msra.mxu0 %v128
    %1011 = vmatprep.subr.bf16.mxu0 0
    %1012 = vmatpush1.bf16.msra.mxu0 %v127
    %1013 = vmatprep.subr.bf16.mxu0 0
    %1014 = vmatpush1.bf16.msra.mxu0 %v126
    %1015 = vmatprep.subr.bf16.mxu0 0
    %1016 = vmatpush2.bf16.msra.mxu0 %v141
    %1017 = vmatprep.subr.bf16.mxu0 0
    %1018 = vmatpush2.bf16.msra.mxu0 %v140
    %1019 = vmatprep.subr.bf16.mxu0 0
    %1020 = vmatpush2.bf16.msra.mxu0 %v139
    %1021 = vmatprep.subr.bf16.mxu0 0
    %1022 = vmatpush2.bf16.msra.mxu0 %v138
    %1023 = vmatprep.subr.bf16.mxu0 0
    %1024 = vmatpush2.bf16.msra.mxu0 %v137
    %1025 = vmatprep.subr.bf16.mxu0 0
    %1026 = vmatpush2.bf16.msra.mxu0 %v136
    %1027 = vmatprep.subr.bf16.mxu0 0
    %1028 = vmatpush2.bf16.msra.mxu0 %v135
    %1029 = vmatprep.subr.bf16.mxu0 0
    %1030 = vmatpush2.bf16.msra.mxu0 %v134
    %1031 = vmatprep.mubr.bf16.mxu0 %v922
    %1032 = vmatmul.mubr.bf16.gmra.mxu0 %v908
    %v1033 = vpop.f32.mrf.mxu0
    %v1034 = vadd.f32 %v878, %v1033
    %v1035 = vpop.f32.mrf.mxu0
    %v1036 = vpop.f32.mrf.mxu0
    %v1037 = vpop.f32.mrf.mxu0
    %1038 = vdwg.mxu0
    %1039 = vmatprep.subr.bf16.mxu0 0
    %1040 = vmatpush1.bf16.msra.mxu0 %v149
    %1041 = vmatprep.subr.bf16.mxu0 0
    %1042 = vmatpush1.bf16.msra.mxu0 %v148
    %1043 = vmatprep.subr.bf16.mxu0 0
    %1044 = vmatpush1.bf16.msra.mxu0 %v147
    %1045 = vmatprep.subr.bf16.mxu0 0
    %1046 = vmatpush1.bf16.msra.mxu0 %v146
    %1047 = vmatprep.subr.bf16.mxu0 0
    %1048 = vmatpush1.bf16.msra.mxu0 %v145
    %1049 = vmatprep.subr.bf16.mxu0 0
    %1050 = vmatpush1.bf16.msra.mxu0 %v144
    %1051 = vmatprep.subr.bf16.mxu0 0
    %1052 = vmatpush1.bf16.msra.mxu0 %v143
    %1053 = vmatprep.subr.bf16.mxu0 0
    %1054 = vmatpush1.bf16.msra.mxu0 %v142
    %1055 = vmatprep.subr.bf16.mxu0 0
    %1056 = vmatpush2.bf16.msra.mxu0 %v157
    %1057 = vmatprep.subr.bf16.mxu0 0
    %1058 = vmatpush2.bf16.msra.mxu0 %v156
    %1059 = vmatprep.subr.bf16.mxu0 0
    %1060 = vmatpush2.bf16.msra.mxu0 %v155
    %1061 = vmatprep.subr.bf16.mxu0 0
    %1062 = vmatpush2.bf16.msra.mxu0 %v154
    %1063 = vmatprep.subr.bf16.mxu0 0
    %1064 = vmatpush2.bf16.msra.mxu0 %v153
    %1065 = vmatprep.subr.bf16.mxu0 0
    %1066 = vmatpush2.bf16.msra.mxu0 %v152
    %1067 = vmatprep.subr.bf16.mxu0 0
    %1068 = vmatpush2.bf16.msra.mxu0 %v151
    %1069 = vmatprep.subr.bf16.mxu0 0
    %1070 = vmatpush2.bf16.msra.mxu0 %v150
    %1071 = vmatprep.mubr.bf16.mxu0 %v932
    %1072 = vmatmul.mubr.bf16.gmra.mxu0 %v930
    %v1073 = vpop.f32.mrf.mxu0
    %v1074 = vadd.f32 %v1034, %v1073
    %v1075 = vpop.f32.mrf.mxu0
    %v1076 = vpop.f32.mrf.mxu0
    %v1077 = vpop.f32.mrf.mxu0
    %1078 = vdwg.mxu0
    %1079 = vmatprep.subr.bf16.mxu0 0
    %1080 = vmatpush1.bf16.msra.mxu0 %v165
    %1081 = vmatprep.subr.bf16.mxu0 0
    %1082 = vmatpush1.bf16.msra.mxu0 %v164
    %1083 = vmatprep.subr.bf16.mxu0 0
    %1084 = vmatpush1.bf16.msra.mxu0 %v163
    %1085 = vmatprep.subr.bf16.mxu0 0
    %1086 = vmatpush1.bf16.msra.mxu0 %v162
    %1087 = vmatprep.subr.bf16.mxu0 0
    %1088 = vmatpush1.bf16.msra.mxu0 %v161
    %1089 = vmatprep.subr.bf16.mxu0 0
    %1090 = vmatpush1.bf16.msra.mxu0 %v160
    %1091 = vmatprep.subr.bf16.mxu0 0
    %1092 = vmatpush1.bf16.msra.mxu0 %v159
    %1093 = vmatprep.subr.bf16.mxu0 0
    %1094 = vmatpush1.bf16.msra.mxu0 %v158
    %1095 = vmatprep.subr.bf16.mxu0 0
    %1096 = vmatpush2.bf16.msra.mxu0 %v173
    %1097 = vmatprep.subr.bf16.mxu0 0
    %1098 = vmatpush2.bf16.msra.mxu0 %v172
    %1099 = vmatprep.subr.bf16.mxu0 0
    %1100 = vmatpush2.bf16.msra.mxu0 %v171
    %1101 = vmatprep.subr.bf16.mxu0 0
    %1102 = vmatpush2.bf16.msra.mxu0 %v170
    %1103 = vmatprep.subr.bf16.mxu0 0
    %1104 = vmatpush2.bf16.msra.mxu0 %v169
    %1105 = vmatprep.subr.bf16.mxu0 0
    %1106 = vmatpush2.bf16.msra.mxu0 %v168
    %1107 = vmatprep.subr.bf16.mxu0 0
    %1108 = vmatpush2.bf16.msra.mxu0 %v167
    %1109 = vmatprep.subr.bf16.mxu0 0
    %1110 = vmatpush2.bf16.msra.mxu0 %v166
    %1111 = vmatprep.mubr.bf16.mxu0 %v929
    %1112 = vmatmul.mubr.bf16.gmra.mxu0 %v915
    %v1113 = vpop.f32.mrf.mxu0
    %v1114 = vadd.f32 %v1074, %v1113
    %v1115 = vpop.f32.mrf.mxu0
    %v1116 = vpop.f32.mrf.mxu0
    %v1117 = vpop.f32.mrf.mxu0
    %1118 = vdwg.mxu0
    %1119 = vmatprep.subr.bf16.mxu0 0
    %1120 = vmatpush1.bf16.msra.mxu0 %v181
    %1121 = vmatprep.subr.bf16.mxu0 0
    %1122 = vmatpush1.bf16.msra.mxu0 %v180
    %1123 = vmatprep.subr.bf16.mxu0 0
    %1124 = vmatpush1.bf16.msra.mxu0 %v179
    %1125 = vmatprep.subr.bf16.mxu0 0
    %1126 = vmatpush1.bf16.msra.mxu0 %v178
    %1127 = vmatprep.subr.bf16.mxu0 0
    %1128 = vmatpush1.bf16.msra.mxu0 %v177
    %1129 = vmatprep.subr.bf16.mxu0 0
    %1130 = vmatpush1.bf16.msra.mxu0 %v176
    %1131 = vmatprep.subr.bf16.mxu0 0
    %1132 = vmatpush1.bf16.msra.mxu0 %v175
    %1133 = vmatprep.subr.bf16.mxu0 0
    %1134 = vmatpush1.bf16.msra.mxu0 %v174
    %1135 = vmatprep.subr.bf16.mxu0 0
    %1136 = vmatpush2.bf16.msra.mxu0 %v189
    %1137 = vmatprep.subr.bf16.mxu0 0
    %1138 = vmatpush2.bf16.msra.mxu0 %v188
    %1139 = vmatprep.subr.bf16.mxu0 0
    %1140 = vmatpush2.bf16.msra.mxu0 %v187
    %1141 = vmatprep.subr.bf16.mxu0 0
    %1142 = vmatpush2.bf16.msra.mxu0 %v186
    %1143 = vmatprep.subr.bf16.mxu0 0
    %1144 = vmatpush2.bf16.msra.mxu0 %v185
    %1145 = vmatprep.subr.bf16.mxu0 0
    %1146 = vmatpush2.bf16.msra.mxu0 %v184
    %1147 = vmatprep.subr.bf16.mxu0 0
    %1148 = vmatpush2.bf16.msra.mxu0 %v183
    %1149 = vmatprep.subr.bf16.mxu0 0
    %1150 = vmatpush2.bf16.msra.mxu0 %v182
    %1151 = vmatprep.mubr.bf16.mxu0 %v933
    %1152 = vmatmul.mubr.bf16.gmra.mxu0 %v931
    %v1153 = vpop.f32.mrf.mxu0
    %v1154 = vadd.f32 %v1114, %v1153
    %v1155 = vpop.f32.mrf.mxu0
    %v1156 = vpop.f32.mrf.mxu0
    %v1157 = vpop.f32.mrf.mxu0
    %1158 = vdwg.mxu0
    %1159 = vmatprep.subr.bf16.mxu0 0
    %1160 = vmatpush1.bf16.msra.mxu0 %v197
    %1161 = vmatprep.subr.bf16.mxu0 0
    %1162 = vmatpush1.bf16.msra.mxu0 %v196
    %1163 = vmatprep.subr.bf16.mxu0 0
    %1164 = vmatpush1.bf16.msra.mxu0 %v195
    %1165 = vmatprep.subr.bf16.mxu0 0
    %1166 = vmatpush1.bf16.msra.mxu0 %v194
    %1167 = vmatprep.subr.bf16.mxu0 0
    %1168 = vmatpush1.bf16.msra.mxu0 %v193
    %1169 = vmatprep.subr.bf16.mxu0 0
    %1170 = vmatpush1.bf16.msra.mxu0 %v192
    %1171 = vmatprep.subr.bf16.mxu0 0
    %1172 = vmatpush1.bf16.msra.mxu0 %v191
    %1173 = vmatprep.subr.bf16.mxu0 0
    %1174 = vmatpush1.bf16.msra.mxu0 %v190
    %1175 = vmatprep.subr.bf16.mxu0 0
    %1176 = vmatpush2.bf16.msra.mxu0 %v205
    %1177 = vmatprep.subr.bf16.mxu0 0
    %1178 = vmatpush2.bf16.msra.mxu0 %v204
    %1179 = vmatprep.subr.bf16.mxu0 0
    %1180 = vmatpush2.bf16.msra.mxu0 %v203
    %1181 = vmatprep.subr.bf16.mxu0 0
    %1182 = vmatpush2.bf16.msra.mxu0 %v202
    %1183 = vmatprep.subr.bf16.mxu0 0
    %1184 = vmatpush2.bf16.msra.mxu0 %v201
    %1185 = vmatprep.subr.bf16.mxu0 0
    %1186 = vmatpush2.bf16.msra.mxu0 %v200
    %1187 = vmatprep.subr.bf16.mxu0 0
    %1188 = vmatpush2.bf16.msra.mxu0 %v199
    %1189 = vmatprep.subr.bf16.mxu0 0
    %1190 = vmatpush2.bf16.msra.mxu0 %v198
    %1191 = vmatprep.mubr.bf16.mxu0 %v971
    %1192 = vmatmul.mubr.bf16.gmra.mxu0 %v957
    %v1193 = vpop.f32.mrf.mxu0
    %v1194 = vadd.f32 %v1154, %v1193
    %v1195 = vpop.f32.mrf.mxu0
    %v1196 = vpop.f32.mrf.mxu0
    %v1197 = vpop.f32.mrf.mxu0
    %1198 = vdwg.mxu0
    %1199 = vmatprep.subr.bf16.mxu0 0
    %1200 = vmatpush1.bf16.msra.mxu0 %v213
    %1201 = vmatprep.subr.bf16.mxu0 0
    %1202 = vmatpush1.bf16.msra.mxu0 %v212
    %1203 = vmatprep.subr.bf16.mxu0 0
    %1204 = vmatpush1.bf16.msra.mxu0 %v211
    %1205 = vmatprep.subr.bf16.mxu0 0
    %1206 = vmatpush1.bf16.msra.mxu0 %v210
    %1207 = vmatprep.subr.bf16.mxu0 0
    %1208 = vmatpush1.bf16.msra.mxu0 %v209
    %1209 = vmatprep.subr.bf16.mxu0 0
    %1210 = vmatpush1.bf16.msra.mxu0 %v208
    %1211 = vmatprep.subr.bf16.mxu0 0
    %1212 = vmatpush1.bf16.msra.mxu0 %v207
    %1213 = vmatprep.subr.bf16.mxu0 0
    %1214 = vmatpush1.bf16.msra.mxu0 %v206
    %1215 = vmatprep.subr.bf16.mxu0 0
    %1216 = vmatpush2.bf16.msra.mxu0 %v221
    %1217 = vmatprep.subr.bf16.mxu0 0
    %1218 = vmatpush2.bf16.msra.mxu0 %v220
    %1219 = vmatprep.subr.bf16.mxu0 0
    %1220 = vmatpush2.bf16.msra.mxu0 %v219
    %1221 = vmatprep.subr.bf16.mxu0 0
    %1222 = vmatpush2.bf16.msra.mxu0 %v218
    %1223 = vmatprep.subr.bf16.mxu0 0
    %1224 = vmatpush2.bf16.msra.mxu0 %v217
    %1225 = vmatprep.subr.bf16.mxu0 0
    %1226 = vmatpush2.bf16.msra.mxu0 %v216
    %1227 = vmatprep.subr.bf16.mxu0 0
    %1228 = vmatpush2.bf16.msra.mxu0 %v215
    %1229 = vmatprep.subr.bf16.mxu0 0
    %1230 = vmatpush2.bf16.msra.mxu0 %v214
    %1231 = vmatprep.mubr.bf16.mxu0 %v981
    %1232 = vmatmul.mubr.bf16.gmra.mxu0 %v979
    %v1233 = vpop.f32.mrf.mxu0
    %v1234 = vadd.f32 %v1194, %v1233
    %v1235 = vpop.f32.mrf.mxu0
    %v1236 = vpop.f32.mrf.mxu0
    %v1237 = vpop.f32.mrf.mxu0
    %1238 = vdwg.mxu0
    %1239 = vmatprep.subr.bf16.mxu0 0
    %1240 = vmatpush1.bf16.msra.mxu0 %v229
    %1241 = vmatprep.subr.bf16.mxu0 0
    %1242 = vmatpush1.bf16.msra.mxu0 %v228
    %1243 = vmatprep.subr.bf16.mxu0 0
    %1244 = vmatpush1.bf16.msra.mxu0 %v227
    %1245 = vmatprep.subr.bf16.mxu0 0
    %1246 = vmatpush1.bf16.msra.mxu0 %v226
    %1247 = vmatprep.subr.bf16.mxu0 0
    %1248 = vmatpush1.bf16.msra.mxu0 %v225
    %1249 = vmatprep.subr.bf16.mxu0 0
    %1250 = vmatpush1.bf16.msra.mxu0 %v224
    %1251 = vmatprep.subr.bf16.mxu0 0
    %1252 = vmatpush1.bf16.msra.mxu0 %v223
    %1253 = vmatprep.subr.bf16.mxu0 0
    %1254 = vmatpush1.bf16.msra.mxu0 %v222
    %1255 = vmatprep.subr.bf16.mxu0 0
    %1256 = vmatpush2.bf16.msra.mxu0 %v237
    %1257 = vmatprep.subr.bf16.mxu0 0
    %1258 = vmatpush2.bf16.msra.mxu0 %v236
    %1259 = vmatprep.subr.bf16.mxu0 0
    %1260 = vmatpush2.bf16.msra.mxu0 %v235
    %1261 = vmatprep.subr.bf16.mxu0 0
    %1262 = vmatpush2.bf16.msra.mxu0 %v234
    %1263 = vmatprep.subr.bf16.mxu0 0
    %1264 = vmatpush2.bf16.msra.mxu0 %v233
    %1265 = vmatprep.subr.bf16.mxu0 0
    %1266 = vmatpush2.bf16.msra.mxu0 %v232
    %1267 = vmatprep.subr.bf16.mxu0 0
    %1268 = vmatpush2.bf16.msra.mxu0 %v231
    %1269 = vmatprep.subr.bf16.mxu0 0
    %1270 = vmatpush2.bf16.msra.mxu0 %v230
    %1271 = vmatprep.mubr.bf16.mxu0 %v978
    %1272 = vmatmul.mubr.bf16.gmra.mxu0 %v964
    %v1273 = vpop.f32.mrf.mxu0
    %v1274 = vadd.f32 %v1234, %v1273
    %v1275 = vpop.f32.mrf.mxu0
    %v1276 = vpop.f32.mrf.mxu0
    %v1277 = vpop.f32.mrf.mxu0
    %1278 = vdwg.mxu0
    %1279 = vmatprep.subr.bf16.mxu0 0
    %1280 = vmatpush1.bf16.msra.mxu0 %v245
    %1281 = vmatprep.subr.bf16.mxu0 0
    %1282 = vmatpush1.bf16.msra.mxu0 %v244
    %1283 = vmatprep.subr.bf16.mxu0 0
    %1284 = vmatpush1.bf16.msra.mxu0 %v243
    %1285 = vmatprep.subr.bf16.mxu0 0
    %1286 = vmatpush1.bf16.msra.mxu0 %v242
    %1287 = vmatprep.subr.bf16.mxu0 0
    %1288 = vmatpush1.bf16.msra.mxu0 %v241
    %1289 = vmatprep.subr.bf16.mxu0 0
    %1290 = vmatpush1.bf16.msra.mxu0 %v240
    %1291 = vmatprep.subr.bf16.mxu0 0
    %1292 = vmatpush1.bf16.msra.mxu0 %v239
    %1293 = vmatprep.subr.bf16.mxu0 0
    %1294 = vmatpush1.bf16.msra.mxu0 %v238
    %1295 = vmatprep.subr.bf16.mxu0 0
    %1296 = vmatpush2.bf16.msra.mxu0 %v253
    %1297 = vmatprep.subr.bf16.mxu0 0
    %1298 = vmatpush2.bf16.msra.mxu0 %v252
    %1299 = vmatprep.subr.bf16.mxu0 0
    %1300 = vmatpush2.bf16.msra.mxu0 %v251
    %1301 = vmatprep.subr.bf16.mxu0 0
    %1302 = vmatpush2.bf16.msra.mxu0 %v250
    %1303 = vmatprep.subr.bf16.mxu0 0
    %1304 = vmatpush2.bf16.msra.mxu0 %v249
    %1305 = vmatprep.subr.bf16.mxu0 0
    %1306 = vmatpush2.bf16.msra.mxu0 %v248
    %1307 = vmatprep.subr.bf16.mxu0 0
    %1308 = vmatpush2.bf16.msra.mxu0 %v247
    %1309 = vmatprep.subr.bf16.mxu0 0
    %1310 = vmatpush2.bf16.msra.mxu0 %v246
    %1311 = vmatprep.mubr.bf16.mxu0 %v982
    %1312 = vmatmul.mubr.bf16.gmra.mxu0 %v980
    %v1313 = vpop.f32.mrf.mxu0
    %v1314 = vadd.f32 %v1274, %v1313
    %v1315 = vpop.f32.mrf.mxu0
    %v1316 = vpop.f32.mrf.mxu0
    %v1317 = vpop.f32.mrf.mxu0
    %1318 = vdwg.mxu0
    %v1319 = vld [vmem:[%s2] sm:$0x1]
    %v1321 = vlaneseq
    %v1322 = vshrl.u32 %v1321, 7
    %v1323 = vsub.s32 0, %v1322
    %v1324 = vrot.slane %v1319, %v1323
    %v1326 = vmul.f32 %v1314, %v1324
    %v1327 = vld [vmem:[#allocation6] sm:$0x1]
    %v1329 = vlaneseq
    %v1330 = vshrl.u32 %v1329, 7
    %v1331 = vsub.s32 0, %v1330
    %v1332 = vrot.slane %v1327, %v1331
    %v1334 = vadd.f32 %v1326, %v1332
    %1335 = vst [vmem:[%s4] sm:$0x3] %v1334
    // Predicated region
    $region30: #{forward.1} parent=1 // pred_check
      _
    $region31: #{forward.1} parent=1 // pred_check_branch
      %1337 = sbr.rel (0) target = $region33
    $region32: #{forward.1} parent=1 // pred_region
      _
    $region33: #{forward.1} parent=1 // pred_fallthru
      _
    // Predicated region
    $region34: #{forward.1} parent=1 // pred_check
      _
    $region35: #{forward.1} parent=1 // pred_check_branch
      %1339 = sbr.rel (0) target = $region37
    $region36: #{forward.1} parent=1 // pred_region
      _
    $region37: #{forward.1} parent=1 // pred_fallthru
      _
    %1340 = vsyncpa [#allocation3], 1
    %1341 = vsyncpa [#allocation5], 1

</llo_original>
